<compile_context>
chip_gen: v6e
topology: v6e:2x2x1
jax: 0.10.0
libtpu: 0.0.40
codegen_flags: <defaults>
</compile_context>

<pallas_src>
import functools

import jax
import jax.numpy as jnp
from jax.experimental import pallas as pl
from jax.experimental.pallas import tpu as pltpu


_LANE = 128
_SUBLANE = 8
_TARGET_BLOCK_BYTES = 8 << 20   # per-input-block HBM sweet spot
_MIN_SPLIT_BYTES = 2 << 20      # only force a multi-step grid above this size


# ---------------------------------------------------------------------------
# Tile / VMEM sizing helpers
# ---------------------------------------------------------------------------
def _round_up(x, m):
    return ((x + m - 1) // m) * m


def _vmem_capacity_bytes():
    try:
        info = pltpu.get_tpu_info()
        for attr in ("vmem_capacity_bytes", "vmem_bytes", "vmem_size_bytes"):
            v = getattr(info, attr, None)
            if v:
                return int(v)
    except Exception:
        pass
    # Fall back per device kind: v5e/v6e (and older) have 128 MiB VMEM per
    # TensorCore, v7x only 64 MiB.  Unknown -> conservative 64 MiB.
    try:
        kind = jax.devices()[0].device_kind.lower()
    except Exception:
        kind = ""
    if any(t in kind for t in ("v2", "v3", "v4", "v5", "v6")):
        return 128 * 1024 * 1024
    return 64 * 1024 * 1024


def _tile_budget_bytes():
    vmem = _vmem_capacity_bytes()
    if vmem >= (96 << 20):                 # v5e / v6e: 128 MiB / TC
        return min(vmem // 3, 48 << 20)
    return min(vmem // 3, 20 << 20)        # v7x: 64 MiB / TC


def _vmem_limit_bytes(tile_elems, in_itemsize, out_itemsize):
    # Double-buffered in/out blocks + ~4x f32 intermediates + headroom for
    # the small operands (weights, S matrix) and compiler scratch.
    vmem = _vmem_capacity_bytes()
    needed = (2 * tile_elems * (in_itemsize + out_itemsize)
              + 4 * tile_elems * 4 + (8 << 20))
    return int(max(32 << 20, min(needed, int(vmem * 0.9))))


def _pick_row_tile(n_rows, row_elems, itemsize):
    """Sublane-aligned row tile sized by the real per-step VMEM footprint."""
    budget = _tile_budget_bytes()
    # dbuf in + dbuf out + ~3 f32 intermediates (x, x*x, y) per row.
    per_row = row_elems * (4 * itemsize + 12)
    t = budget // max(1, per_row)
    # Keep the HBM input block itself in the 2-8 MiB sweet spot.
    t = min(t, max(_SUBLANE, _TARGET_BLOCK_BYTES // max(1, row_elems * itemsize)))
    t = max(_SUBLANE, (t // _SUBLANE) * _SUBLANE)
    # Target >= 4 grid steps (>= 2 pipelined steps per TensorCore on v7x) once
    # the tensor is big enough that splitting is free.
    total_bytes = n_rows * row_elems * itemsize
    if total_bytes >= _MIN_SPLIT_BYTES and n_rows >= 4 * _SUBLANE:
        t = min(t, _round_up(pl.cdiv(n_rows, 4), _SUBLANE))
    t = min(t, _round_up(n_rows, _SUBLANE))
    return max(t, _SUBLANE)


# ---------------------------------------------------------------------------
# Kernels
# ---------------------------------------------------------------------------
def _ln_rows_kernel(x_ref, wb_ref, o_ref, *, eps, inv_c):
    # x_ref: (tile, C); wb_ref: (2, C) f32 (row 0 = weight, row 1 = bias).
    x = x_ref[...].astype(jnp.float32)
    wb = wb_ref[...]
    s1 = jnp.sum(x, axis=-1, keepdims=True)
    s2 = jnp.sum(x * x, axis=-1, keepdims=True)
    mean = s1 * inv_c
    var = jnp.maximum(s2 * inv_c - mean * mean, 0.0)   # cancellation safety
    inv = jax.lax.rsqrt(var + eps)
    o_ref[...] = ((x - mean) * inv * wb[0:1, :] + wb[1:2, :]).astype(o_ref.dtype)


def _ln_rows_packed_kernel(x_ref, s_ref, wb_ref, o_ref, *, eps, inv_c):
    # x_ref: (tile, 128) with k = 128//C logical rows packed per vreg row.
    # s_ref: (128, 128) 0/1 group matrix; x @ S = per-lane group sums on the
    # otherwise idle MXU.  S is exactly representable in bf16 (S_lo == 0), so
    # Precision.HIGH matches HIGHEST here at half the MXU passes (matters on
    # v5e's 4x smaller MXU).  Do NOT reuse HIGH for a non-0/1 reduction matrix.
    x = x_ref[...].astype(jnp.float32)
    S = s_ref[...]
    wb = wb_ref[...]
    s1 = jnp.dot(x, S, preferred_element_type=jnp.float32,
                 precision=jax.lax.Precision.HIGH)
    s2 = jnp.dot(x * x, S, preferred_element_type=jnp.float32,
                 precision=jax.lax.Precision.HIGH)
    mean = s1 * inv_c
    var = jnp.maximum(s2 * inv_c - mean * mean, 0.0)
    inv = jax.lax.rsqrt(var + eps)
    o_ref[...] = ((x - mean) * inv * wb[0:1, :] + wb[1:2, :]).astype(o_ref.dtype)


def _ln_cfirst_kernel(x_ref, wb_ref, o_ref, *, eps, inv_c):
    # x_ref: (tile_b, C, tile_hw); wb_ref: (2, C, 1) f32.  Normalize over C
    # (sublane axis) directly on the NCHW layout: no transposes anywhere.
    x = x_ref[...].astype(jnp.float32)
    wb = wb_ref[...]
    s1 = jnp.sum(x, axis=1, keepdims=True)
    s2 = jnp.sum(x * x, axis=1, keepdims=True)
    mean = s1 * inv_c
    var = jnp.maximum(s2 * inv_c - mean * mean, 0.0)
    inv = jax.lax.rsqrt(var + eps)
    o_ref[...] = ((x - mean) * inv * wb[0:1] + wb[1:2]).astype(o_ref.dtype)


# ---------------------------------------------------------------------------
# Wrappers
# ---------------------------------------------------------------------------
def _layer_norm_rows_plain(x2d, w32, b32, eps):
    n, c = x2d.shape
    isz = x2d.dtype.itemsize
    tile = _pick_row_tile(n, c, isz)
    grid = (pl.cdiv(n, tile),)
    wb = jnp.stack([w32, b32], axis=0)                    # (2, C)
    kernel = functools.partial(_ln_rows_kernel, eps=float(eps), inv_c=1.0 / c)
    return pl.pallas_call(
        kernel,
        out_shape=jax.ShapeDtypeStruct((n, c), x2d.dtype),
        grid_spec=pltpu.PrefetchScalarGridSpec(
            num_scalar_prefetch=0,
            grid=grid,
            in_specs=[
                pl.BlockSpec((tile, c), lambda i: (i, 0)),
                pl.BlockSpec((2, c), lambda i: (0, 0)),
            ],
            out_specs=pl.BlockSpec((tile, c), lambda i: (i, 0)),
        ),
        compiler_params=pltpu.CompilerParams(
            dimension_semantics=("parallel",),
            vmem_limit_bytes=_vmem_limit_bytes(tile * c, isz, isz),
        ),
        cost_estimate=pl.CostEstimate(
            flops=9 * n * c,
            transcendentals=n,
            bytes_accessed=2 * n * c * isz + 2 * c * 4,
        ),
    )(x2d, wb)


def _layer_norm_rows_packed(x2d, w32, b32, eps, k):
    n, c = x2d.shape
    isz = x2d.dtype.itemsize
    n_packed = n // k
    width = k * c                                          # == 128
    xp = x2d.reshape(n_packed, width)                      # free reshape
    tile = _pick_row_tile(n_packed, width, isz)
    grid = (pl.cdiv(n_packed, tile),)
    # Group-sum matrix: S[i, j] = 1 iff lanes i, j hold the same logical row.
    g = jnp.arange(width, dtype=jnp.int32) // c
    S = (g[:, None] == g[None, :]).astype(jnp.float32)
    wb = jnp.stack([jnp.tile(w32, k), jnp.tile(b32, k)], axis=0)   # (2, 128)
    kernel = functools.partial(_ln_rows_packed_kernel, eps=float(eps), inv_c=1.0 / c)
    out = pl.pallas_call(
        kernel,
        out_shape=jax.ShapeDtypeStruct((n_packed, width), x2d.dtype),
        grid_spec=pltpu.PrefetchScalarGridSpec(
            num_scalar_prefetch=0,
            grid=grid,
            in_specs=[
                pl.BlockSpec((tile, width), lambda i: (i, 0)),
                pl.BlockSpec((width, width), lambda i: (0, 0)),
                pl.BlockSpec((2, width), lambda i: (0, 0)),
            ],
            out_specs=pl.BlockSpec((tile, width), lambda i: (i, 0)),
        ),
        compiler_params=pltpu.CompilerParams(
            dimension_semantics=("parallel",),
            vmem_limit_bytes=_vmem_limit_bytes(tile * width, isz, isz),
        ),
        cost_estimate=pl.CostEstimate(
            flops=(9 * c + 4 * width) * n,
            transcendentals=n,
            bytes_accessed=2 * n * c * isz + width * width * 4 + 2 * width * 4,
        ),
    )(xp, S, wb)
    return out.reshape(n, c)


def _layer_norm_rows(x2d, w32, b32, eps):
    n, c = x2d.shape
    if c < _LANE and _LANE % c == 0:
        k = _LANE // c
        if n % k == 0:
            return _layer_norm_rows_packed(x2d, w32, b32, eps, k)
        # NOTE: a bulk(packed)+remainder(plain) split would add a full
        # concatenate copy of the output — more HBM traffic than the masked-
        # store waste it avoids on this HBM-bound op — so the ragged small-C
        # case stays on the plain path.
    return _layer_norm_rows_plain(x2d, w32, b32, eps)


def _layer_norm_channels_first(x, w32, b32, eps):
    b, c, h, w = x.shape
    hw = h * w
    x3 = x.reshape(b, c, hw)                     # free reshape; no transposes
    isz = x.dtype.itemsize
    budget = _tile_budget_bytes()
    per_col = c * (4 * isz + 12)                 # per-HW-column VMEM footprint
    total_bytes = b * c * hw * isz

    # Lane (HW) tile: multiple of 128 or the full extent, byte-sized blocks.
    t_hw = budget // max(1, per_col)
    t_hw = min(t_hw, max(_LANE, _TARGET_BLOCK_BYTES // max(1, c * isz)))
    t_hw = max(_LANE, (t_hw // _LANE) * _LANE)
    if total_bytes >= _MIN_SPLIT_BYTES and b < 4 and hw >= 4 * _LANE:
        # Ensure the (batch x hw) grid has >= 4 steps (>= 2 per TC on v7x).
        t_hw = min(t_hw, _round_up(pl.cdiv(hw, pl.cdiv(4, b)), _LANE))
    if t_hw >= hw:
        t_hw = hw

    # Batch tile: fatten the per-step DMA when the whole HW extent fits in a
    # single block (small-H*W case) instead of issuing tiny per-image blocks.
    if t_hw == hw:
        per_batch = hw * per_col
        t_b = budget // max(1, per_batch)
        t_b = min(t_b, max(1, _TARGET_BLOCK_BYTES // max(1, c * hw * isz)))
        if total_bytes >= _MIN_SPLIT_BYTES:
            t_b = min(t_b, max(1, pl.cdiv(b, 4)))
        t_b = int(max(1, min(t_b, b)))
    else:
        t_b = 1

    grid = (pl.cdiv(b, t_b), pl.cdiv(hw, t_hw))
    wb = jnp.stack([w32, b32], axis=0).reshape(2, c, 1)
    kernel = functools.partial(_ln_cfirst_kernel, eps=float(eps), inv_c=1.0 / c)
    out = pl.pallas_call(
        kernel,
        out_shape=jax.ShapeDtypeStruct((b, c, hw), x.dtype),
        grid_spec=pltpu.PrefetchScalarGridSpec(
            num_scalar_prefetch=0,
            grid=grid,
            in_specs=[
                pl.BlockSpec((t_b, c, t_hw), lambda i, j: (i, 0, j)),
                pl.BlockSpec((2, c, 1), lambda i, j: (0, 0, 0)),
            ],
            out_specs=pl.BlockSpec((t_b, c, t_hw), lambda i, j: (i, 0, j)),
        ),
        compiler_params=pltpu.CompilerParams(
            dimension_semantics=("parallel", "parallel"),
            vmem_limit_bytes=_vmem_limit_bytes(t_b * c * t_hw, isz, isz),
        ),
        cost_estimate=pl.CostEstimate(
            flops=9 * b * c * hw,
            transcendentals=b * hw,
            bytes_accessed=2 * b * c * hw * isz + 2 * c * 4,
        ),
    )(x3, wb)
    return out.reshape(b, c, h, w)


def layer_norm(x, weight, bias, eps=1e-6, data_format="channels_last"):
    """Matches the PyTorch LayerNorm module's forward (1-D normalized_shape)."""
    w32 = weight.astype(jnp.float32)
    b32 = bias.astype(jnp.float32)
    if data_format == "channels_last":
        c = x.shape[-1]
        y = _layer_norm_rows(x.reshape(-1, c), w32, b32, eps)
        return y.reshape(x.shape)
    elif data_format == "channels_first":
        return _layer_norm_channels_first(x, w32, b32, eps)
    else:
        raise NotImplementedError(data_format)


# ---------------------------------------------------------------------------
# Reference + tests
# ---------------------------------------------------------------------------
def _reference_layer_norm(x, weight, bias, eps, data_format):
    x = x.astype(jnp.float32)
    if data_format == "channels_last":
        u = jnp.mean(x, axis=-1, keepdims=True)
        s = jnp.mean((x - u) ** 2, axis=-1, keepdims=True)
        xn = (x - u) / jnp.sqrt(s + eps)
        return xn * weight + bias
    else:  # channels_first, NCHW
        u = jnp.mean(x, axis=1, keepdims=True)
        s = jnp.mean((x - u) ** 2, axis=1, keepdims=True)
        xn = (x - u) / jnp.sqrt(s + eps)
        return weight[None, :, None, None] * xn + bias[None, :, None, None]


def _check(name, x, w, b, eps, data_format, atol=1e-4, rtol=1e-4):
    y = layer_norm(x, w, b, eps=eps, data_format=data_format)
    y = jax.block_until_ready(y)
    ref = _reference_layer_norm(x, w, b, eps, data_format)
    assert y.shape == x.shape, f"{name}: shape mismatch {y.shape} vs {x.shape}"
    assert jnp.allclose(y.astype(jnp.float32), ref, atol=atol, rtol=rtol), (
        f"{name}: max abs err = {float(jnp.max(jnp.abs(y.astype(jnp.float32) - ref)))}"
    )


if __name__ == "__main__":
    key = jax.random.PRNGKey(0)
    k1, k2, k3, k4, k5, k6 = jax.random.split(key, 6)
    eps = 1e-6

    # --- channels_first: NCHW (B=2, C=4, H=16, W=16) — transpose-free kernel
    x_cf = jax.random.normal(k1, (2, 4, 16, 16), dtype=jnp.float32)
    w_cf = 1.0 + 0.1 * jax.random.normal(k2, (4,), dtype=jnp.float32)
    b_cf = 0.1 * jax.random.normal(k3, (4,), dtype=jnp.float32)
    _check("channels_first", x_cf, w_cf, b_cf, eps, "channels_first")

    # --- channels_last: NHWC (B=2, H=8, W=8, C=32) — lane-dense packed path
    x_cl = jax.random.normal(k4, (2, 8, 8, 32), dtype=jnp.float32)
    w_cl = 1.0 + 0.1 * jax.random.normal(k5, (32,), dtype=jnp.float32)
    b_cl = 0.1 * jax.random.normal(k6, (32,), dtype=jnp.float32)
    _check("channels_last_packed", x_cl, w_cl, b_cl, eps, "channels_last")

    # --- channels_last, C=128, ragged row count (21 rows) — boundary block
    x_rg = jax.random.normal(k2, (1, 3, 7, 128), dtype=jnp.float32)
    w_rg = 1.0 + 0.1 * jax.random.normal(k3, (128,), dtype=jnp.float32)
    b_rg = 0.1 * jax.random.normal(k4, (128,), dtype=jnp.float32)
    _check("channels_last_ragged", x_rg, w_rg, b_rg, eps, "channels_last")

    # --- channels_first with small, non-aligned C and HW < 128 (batched block)
    x_sm = jax.random.normal(k5, (2, 5, 5, 5), dtype=jnp.float32)
    w_sm = 1.0 + 0.1 * jax.random.normal(k6, (5,), dtype=jnp.float32)
    b_sm = 0.1 * jax.random.normal(k1, (5,), dtype=jnp.float32)
    _check("channels_first_small", x_sm, w_sm, b_sm, eps, "channels_first")

    print("KERNEL_OK")
</pallas_src>

<mosaic_0001>
module attributes {stable_mosaic.version = 11 : i64} {
  func.func @_ln_cfirst_kernel(%arg0: i32, %arg1: i32, %arg2: memref<2x4x256xf32, #tpu.memory_space<vmem>>, %arg3: memref<2x4x1xf32, #tpu.memory_space<vmem>>, %arg4: memref<2x4x256xf32, #tpu.memory_space<vmem>>) attributes {dimension_semantics = [#tpu.dimension_semantics<parallel>, #tpu.dimension_semantics<parallel>], iteration_bounds = array<i64: 1, 1>, scalar_prefetch = 0 : i64, scratch_operands = 0 : i64, tpu.core_type = #tpu.core_type<tc>, window_params = [{transform_indices = @transform_0, window_bounds = array<i64: 2, 4, 256>}, {pipeline_mode = #tpu.pipeline_mode<synchronous>, transform_indices = @transform_1, window_bounds = array<i64: 2, 4, 1>}, {transform_indices = @transform_2, window_bounds = array<i64: 2, 4, 256>}]} {
    %c0 = arith.constant 0 : index
    %c0_0 = arith.constant 0 : index
    %c0_1 = arith.constant 0 : index
    %0 = vector.load %arg2[%c0, %c0_0, %c0_1] : memref<2x4x256xf32, #tpu.memory_space<vmem>>, vector<2x4x256xf32>
    %c0_2 = arith.constant 0 : index
    %c0_3 = arith.constant 0 : index
    %c0_4 = arith.constant 0 : index
    %1 = vector.load %arg3[%c0_2, %c0_3, %c0_4] : memref<2x4x1xf32, #tpu.memory_space<vmem>>, vector<2x4x1xf32>
    %cst = arith.constant dense<0.000000e+00> : vector<2x256xf32>
    %2 = vector.multi_reduction <add>, %0, %cst [1] : vector<2x4x256xf32> to vector<2x256xf32>
    %3 = vector.shape_cast %2 : vector<2x256xf32> to vector<2x1x256xf32>
    %4 = arith.mulf %0, %0 : vector<2x4x256xf32>
    %cst_5 = arith.constant dense<0.000000e+00> : vector<2x256xf32>
    %5 = vector.multi_reduction <add>, %4, %cst_5 [1] : vector<2x4x256xf32> to vector<2x256xf32>
    %6 = vector.shape_cast %5 : vector<2x256xf32> to vector<2x1x256xf32>
    %cst_6 = arith.constant 2.500000e-01 : f32
    %7 = vector.broadcast %cst_6 : f32 to vector<2x1x256xf32>
    %8 = arith.mulf %3, %7 : vector<2x1x256xf32>
    %cst_7 = arith.constant 2.500000e-01 : f32
    %9 = vector.broadcast %cst_7 : f32 to vector<2x1x256xf32>
    %10 = arith.mulf %6, %9 : vector<2x1x256xf32>
    %11 = arith.mulf %8, %8 : vector<2x1x256xf32>
    %12 = arith.subf %10, %11 : vector<2x1x256xf32>
    %cst_8 = arith.constant 0.000000e+00 : f32
    %13 = vector.broadcast %cst_8 : f32 to vector<2x1x256xf32>
    %14 = arith.maximumf %12, %13 : vector<2x1x256xf32>
    %cst_9 = arith.constant 9.99999997E-7 : f32
    %15 = vector.broadcast %cst_9 : f32 to vector<2x1x256xf32>
    %16 = arith.addf %14, %15 : vector<2x1x256xf32>
    %17 = math.rsqrt %16 : vector<2x1x256xf32>
    %18 = vector.broadcast %8 : vector<2x1x256xf32> to vector<2x4x256xf32>
    %19 = arith.subf %0, %18 : vector<2x4x256xf32>
    %20 = vector.broadcast %17 : vector<2x1x256xf32> to vector<2x4x256xf32>
    %21 = arith.mulf %19, %20 : vector<2x4x256xf32>
    %22 = vector.extract_strided_slice %1 {offsets = [0, 0, 0], sizes = [1, 4, 1], strides = [1, 1, 1]} : vector<2x4x1xf32> to vector<1x4x1xf32>
    %23 = vector.broadcast %22 : vector<1x4x1xf32> to vector<2x4x256xf32>
    %24 = arith.mulf %21, %23 : vector<2x4x256xf32>
    %25 = vector.extract_strided_slice %1 {offsets = [1, 0, 0], sizes = [1, 4, 1], strides = [1, 1, 1]} : vector<2x4x1xf32> to vector<1x4x1xf32>
    %26 = vector.broadcast %25 : vector<1x4x1xf32> to vector<2x4x256xf32>
    %27 = arith.addf %24, %26 : vector<2x4x256xf32>
    %c0_10 = arith.constant 0 : index
    %c0_11 = arith.constant 0 : index
    %c0_12 = arith.constant 0 : index
    %28 = vector.load %arg4[%c0_10, %c0_11, %c0_12] : memref<2x4x256xf32, #tpu.memory_space<vmem>>, vector<2x4x256xf32>
    tpu.vector_store %arg4[%c0_10, %c0_11, %c0_12], %27 {strides = array<i32>} : memref<2x4x256xf32, #tpu.memory_space<vmem>>, vector<2x4x256xf32>,
    return
  }
  func.func @transform_0(%arg0: i32, %arg1: i32) -> (i32, i32, i32) {
    %c0_i32 = arith.constant 0 : i32
    %c0_i32_0 = arith.constant 0 : i32
    return %arg0, %c0_i32, %arg1 : i32, i32, i32
  }
  func.func @transform_1(%arg0: i32, %arg1: i32) -> (i32, i32, i32) {
    %c0_i32 = arith.constant 0 : i32
    %c0_i32_0 = arith.constant 0 : i32
    %c0_i32_1 = arith.constant 0 : i32
    %c0_i32_2 = arith.constant 0 : i32
    return %c0_i32, %c0_i32_0, %c0_i32_1 : i32, i32, i32
  }
  func.func @transform_2(%arg0: i32, %arg1: i32) -> (i32, i32, i32) {
    %c0_i32 = arith.constant 0 : i32
    %c0_i32_0 = arith.constant 0 : i32
    return %arg0, %c0_i32, %arg1 : i32, i32, i32
  }
}

</mosaic_0001>

<llo_original>
// kernel: tpu_custom_call.1
$region0: #{tpu_custom_call.1}
  #allocation0 [shape = 'u32[]', space=smem, size = 0x4, offset = 0x4, fixed_abs, tag = 'smem constant byte address 0x4 - core index']
  #allocation1 [shape = 'u32[144,128]{1,0:T(1,128)}', space=vmem, size = 0x12000, scoped, tag = 'internal scratch']
  %s0 = inlined_call_operand.hbm [shape: f32[2,4,256], index: 0, kind: input, shape index: {}]
  %s1 = inlined_call_operand.vmem [shape: f32[2,4,1], index: 1, kind: input, shape index: {}]
  %s2 = inlined_call_operand.hbm [shape: f32[2,4,256], index: 2, kind: output, shape index: {}]
  %s3 = sld [smem:[#allocation0]]
  $region22: #{tpu_custom_call.1} parent=0
    _
  %s5 = ssub.s32 1, %s3
  %s6 = scalar_select 0, %s5, %s3
  $region1: #{tpu_custom_call.1} parent=0
    #allocation2 [shape = 'u8[8192]{0}', space=vmem, size = 0x2000, scoped, tag = 'input window, operand 0, single buffered']
    #allocation3 [shape = 's32[1]{0}', space=sflag, size = 0x4, scoped, tag = 'scoped memory for tpu_custom_call.1']
    #allocation4 [shape = 's32[1]{0}', space=sflag, size = 0x4, scoped, tag = 'scoped memory for tpu_custom_call.1']
    #allocation5 [shape = 'u8[8192]{0}', space=vmem, size = 0x2000, scoped, tag = 'output window, operand 0, single buffered']
    %7 = vsyncpa [#allocation3], 0
    %8 = vsyncpa [#allocation4], 0
    // Predicated region
    $region2: #{tpu_custom_call.1} parent=1 // pred_check
      _
    $region3: #{tpu_custom_call.1} parent=1 // pred_check_branch
      %10 = sbr.rel (0) target = $region5
    $region4: #{tpu_custom_call.1} parent=1 // pred_region
      %s12 = ssub.s32 256, 256
      %13 = vsyncadd [#allocation3], %s12
      %s14 = sshll.u32 [#allocation2], 4
      %s15 = int_to_ptr.vmem [resolvable:$true] %s14
      %20 = dma.hbm_to_vmem [thread:$0]  %s0, 256, %s15, [#allocation3], 128, 128, 8
    $region5: #{tpu_custom_call.1} parent=1 // pred_fallthru
      _
    // Predicated region
    $region6: #{tpu_custom_call.1} parent=1 // pred_check
      _
    $region7: #{tpu_custom_call.1} parent=1 // pred_check_branch
      %22 = sbr.rel (0) target = $region9
    $region8: #{tpu_custom_call.1} parent=1 // pred_region
      _
    $region9: #{tpu_custom_call.1} parent=1 // pred_fallthru
      _
    // Predicated region
    $region10: #{tpu_custom_call.1} parent=1 // pred_check
      _
    $region11: #{tpu_custom_call.1} parent=1 // pred_check_branch
      %24 = sbr.rel (0) target = $region13
    $region12: #{tpu_custom_call.1} parent=1 // pred_region
      %25 = dma.done [#allocation3], 256
    $region13: #{tpu_custom_call.1} parent=1 // pred_fallthru
      _
    %v26 = vld [vmem:[#allocation2] sm:$0xff]
    %v27 = vld [vmem:[#allocation2 + $0x8] sm:$0xff]
    %v28 = vld [vmem:[%s1] sm:$0xf]
    %v29 = vld [vmem:[%s1 + $0x4] sm:$0xf]
    %v32 = vcombine.high %v26, %v26
    %v33 = vcombine.high %v27, %v27
    %vm36 = vcmask 1043456
    %v37 = vsel %vm36, %v26, 0.0
    %v38 = vrot.slane %v37, 4
    %v39 = vadd.f32 %v37, %v38
    %v40 = vrot.slane %v39, 2
    %v41 = vadd.f32 %v39, %v40
    %v42 = vrot.slane %v41, 1
    %v43 = vadd.f32 %v41, %v42
    %v44 = vsel %vm36, %v32, 0.0
    %v45 = vrot.slane %v44, 4
    %v46 = vadd.f32 %v44, %v45
    %v47 = vrot.slane %v46, 2
    %v48 = vadd.f32 %v46, %v47
    %v49 = vrot.slane %v48, 1
    %v50 = vadd.f32 %v48, %v49
    %v51 = vsel %vm36, %v27, 0.0
    %v52 = vrot.slane %v51, 4
    %v53 = vadd.f32 %v51, %v52
    %v54 = vrot.slane %v53, 2
    %v55 = vadd.f32 %v53, %v54
    %v56 = vrot.slane %v55, 1
    %v57 = vadd.f32 %v55, %v56
    %v58 = vsel %vm36, %v33, 0.0
    %v59 = vrot.slane %v58, 4
    %v60 = vadd.f32 %v58, %v59
    %v61 = vrot.slane %v60, 2
    %v62 = vadd.f32 %v60, %v61
    %v63 = vrot.slane %v62, 1
    %v64 = vadd.f32 %v62, %v63
    %v65 = vmul.f32 %v26, %v26
    %v66 = vmul.f32 %v27, %v27
    %v69 = vcombine.high %v65, %v65
    %v70 = vcombine.high %v66, %v66
    %v73 = vsel %vm36, %v65, 0.0
    %v74 = vrot.slane %v73, 4
    %v75 = vadd.f32 %v73, %v74
    %v76 = vrot.slane %v75, 2
    %v77 = vadd.f32 %v75, %v76
    %v78 = vrot.slane %v77, 1
    %v79 = vadd.f32 %v77, %v78
    %v80 = vsel %vm36, %v69, 0.0
    %v81 = vrot.slane %v80, 4
    %v82 = vadd.f32 %v80, %v81
    %v83 = vrot.slane %v82, 2
    %v84 = vadd.f32 %v82, %v83
    %v85 = vrot.slane %v84, 1
    %v86 = vadd.f32 %v84, %v85
    %v87 = vsel %vm36, %v66, 0.0
    %v88 = vrot.slane %v87, 4
    %v89 = vadd.f32 %v87, %v88
    %v90 = vrot.slane %v89, 2
    %v91 = vadd.f32 %v89, %v90
    %v92 = vrot.slane %v91, 1
    %v93 = vadd.f32 %v91, %v92
    %v94 = vsel %vm36, %v70, 0.0
    %v95 = vrot.slane %v94, 4
    %v96 = vadd.f32 %v94, %v95
    %v97 = vrot.slane %v96, 2
    %v98 = vadd.f32 %v96, %v97
    %v99 = vrot.slane %v98, 1
    %v100 = vadd.f32 %v98, %v99
    %v101 = vmul.f32 %v43, 0.25
    %v102 = vmul.f32 %v50, 0.25
    %v103 = vmul.f32 %v57, 0.25
    %v104 = vmul.f32 %v64, 0.25
    %v105 = vmul.f32 %v79, 0.25
    %v106 = vmul.f32 %v86, 0.25
    %v107 = vmul.f32 %v93, 0.25
    %v108 = vmul.f32 %v100, 0.25
    %v109 = vmul.f32 %v101, %v101
    %v110 = vmul.f32 %v102, %v102
    %v111 = vmul.f32 %v103, %v103
    %v112 = vmul.f32 %v104, %v104
    %v113 = vsub.f32 %v105, %v109
    %v114 = vsub.f32 %v106, %v110
    %v115 = vsub.f32 %v107, %v111
    %v116 = vsub.f32 %v108, %v112
    %v117 = vmax.f32 %v113, 0.0
    %v118 = vmax.f32 %v114, 0.0
    %v119 = vmax.f32 %v115, 0.0
    %v120 = vmax.f32 %v116, 0.0
    %v121 = vadd.f32 %v117, 1e-06
    %v122 = vadd.f32 %v118, 1e-06
    %v123 = vadd.f32 %v119, 1e-06
    %v124 = vadd.f32 %v120, 1e-06
    %v125 = vrsqrt.pop %v121
    %v126 = vrsqrt.pop %v122
    %v127 = vrsqrt.pop %v123
    %v128 = vrsqrt.pop %v124
    %v133 = vcombine.low %v101, %v102
    %v134 = vcombine.low %v103, %v104
    %v137 = vsub.f32 %v26, %v133
    %v138 = vsub.f32 %v27, %v134
    %v143 = vcombine.low %v125, %v126
    %v144 = vcombine.low %v127, %v128
    %v147 = vmul.f32 %v137, %v143
    %v148 = vmul.f32 %v138, %v144
    %150 = vset.pattern.permute.xlu0 0
    %151 = vperm.xlu0 %150, %v28
    %v152 = vpop.permute.xlu0 %151
    %v154 = vunpack.c.l.s4 839922192
    %v155 = vunpack.c.0.s8 %v154
    %v156 = vlaneseq
    %v157 = vshrl.u32 %v156, 7
    %v158 = vsub.s32 %v155, %v157
    %v159 = vrot.slane %v152, %v158
    %v161 = vmul.f32 %v147, %v159
    %v162 = vmul.f32 %v148, %v159
    %164 = vset.pattern.permute.xlu0 0
    %165 = vperm.xlu0 %164, %v29
    %v166 = vpop.permute.xlu0 %165
    %v168 = vunpack.c.l.s4 839922192
    %v169 = vunpack.c.0.s8 %v168
    %v170 = vlaneseq
    %v171 = vshrl.u32 %v170, 7
    %v172 = vsub.s32 %v169, %v171
    %v173 = vrot.slane %v166, %v172
    %v175 = vadd.f32 %v161, %v173
    %v176 = vadd.f32 %v162, %v173
    %177 = vst [vmem:[#allocation5] sm:$0xff] %v175
    %178 = vst [vmem:[#allocation5 + $0x8] sm:$0xff] %v176
    // Predicated region
    $region14: #{tpu_custom_call.1} parent=1 // pred_check
      _
    $region15: #{tpu_custom_call.1} parent=1 // pred_check_branch
      %180 = sbr.rel (0) target = $region17
    $region16: #{tpu_custom_call.1} parent=1 // pred_region
      %s182 = ssub.s32 256, 256
      %183 = vsyncadd [#allocation4], %s182
      %s184 = sshll.u32 [#allocation5], 4
      %s185 = int_to_ptr.vmem [resolvable:$true] %s184
      %190 = dma.vmem_to_hbm [thread:$0]  %s185, 256, %s2, [#allocation4], 128, 128, 8
    $region17: #{tpu_custom_call.1} parent=1 // pred_fallthru
      _
    // Predicated region
    $region18: #{tpu_custom_call.1} parent=1 // pred_check
      _
    $region19: #{tpu_custom_call.1} parent=1 // pred_check_branch
      %192 = sbr.rel (0) target = $region21
    $region20: #{tpu_custom_call.1} parent=1 // pred_region
      %193 = dma.done [#allocation4], 256
    $region21: #{tpu_custom_call.1} parent=1 // pred_fallthru
      _
    %194 = vsyncpa [#allocation3], 1
    %195 = vsyncpa [#allocation4], 1

</llo_original>
